<compile_context>
chip_gen: v5e
topology: v5e:2x2
jax: 0.10.0
libtpu: 0.0.40
codegen_flags: <defaults>
</compile_context>

<pallas_src>
import functools
import math

import jax
import jax.numpy as jnp
from jax.experimental import pallas as pl
from jax.experimental.pallas import tpu as pltpu


def _round_up(a, b):
    return (a + b - 1) // b * b


# --------------------------------------------------------------------------
# Kernel
# --------------------------------------------------------------------------
def _amsoftmax_kernel(x_ref, wn_ref, lab_ref, loss_ref, corr_ref,
                      xn_sc, m_sc, l_sc, lbl_sc, amax_sc,
                      *, margin, scale, num_classes, c_tile, mask_classes):
    c = pl.program_id(1)
    n_c = pl.num_programs(1)

    # ---- per-batch-tile init (first class tile only): L2-normalize rows,
    #      fold the softmax scale in, cast to bf16 ONCE.
    @pl.when(c == 0)
    def _init():
        x = x_ref[...].astype(jnp.float32)                                 # (Bt, D)
        inv = jax.lax.rsqrt(
            jnp.maximum(jnp.sum(x * x, axis=1, keepdims=True), 1e-24))
        xn_sc[...] = (x * (inv * scale)).astype(jnp.bfloat16)
        m_sc[...] = jnp.full_like(m_sc, -jnp.inf)
        l_sc[...] = jnp.zeros_like(l_sc)
        lbl_sc[...] = jnp.zeros_like(lbl_sc)
        amax_sc[...] = jnp.zeros_like(amax_sc)

    # ---- scale * cos(theta) on the MXU; W arrives pre-normalized (bf16).
    logits = jnp.dot(xn_sc[...], wn_ref[...],
                     preferred_element_type=jnp.float32)                   # (Bt, Ct) f32

    labels = lab_ref[...]                                                  # (Bt, 1) i32
    col = c * c_tile + jax.lax.broadcasted_iota(jnp.int32, (1, c_tile), 1)  # (1, Ct)
    onehot = col == labels                                                 # (Bt, Ct)

    # Margin subtraction + (optional) class-padding mask fused into a single
    # select + add pass.  Padded classes can never be the label.
    if mask_classes:  # only emitted when the class dim was zero-padded
        neg = jnp.where(col < num_classes, 0.0, -jnp.inf)                  # (1, Ct)
    else:
        neg = 0.0
    logits = logits + jnp.where(onehot, -scale * margin, neg)

    # ---- online softmax statistics + fused first-occurrence argmax
    tile_max = jnp.max(logits, axis=1, keepdims=True)                      # (Bt, 1)
    tile_arg = jnp.min(
        jnp.where(logits == tile_max, col, jnp.iinfo(jnp.int32).max),
        axis=1, keepdims=True)
    m_prev = m_sc[...]
    m_new = jnp.maximum(m_prev, tile_max)
    p = jnp.exp(logits - m_new)
    l_sc[...] = jnp.exp(m_prev - m_new) * l_sc[...] + jnp.sum(p, axis=1, keepdims=True)
    amax_sc[...] = jnp.where(tile_max > m_prev, tile_arg, amax_sc[...])
    m_sc[...] = m_new
    lbl_sc[...] = lbl_sc[...] + jnp.sum(jnp.where(onehot, logits, 0.0),
                                        axis=1, keepdims=True)

    # ---- finalize per-row loss / correctness after the last class tile
    @pl.when(c == n_c - 1)
    def _fin():
        loss_ref[...] = m_sc[...] + jnp.log(l_sc[...]) - lbl_sc[...]
        corr_ref[...] = (amax_sc[...] == lab_ref[...]).astype(jnp.float32)


# --------------------------------------------------------------------------
# Hardware-aware tile selection helpers
# --------------------------------------------------------------------------
def _tpu_vmem_and_cores():
    """(physical VMEM bytes per core, TensorCores visible to one pallas_call)."""
    vmem = 128 * 1024 * 1024
    cores = 1
    try:
        info = pltpu.get_tpu_info()
        vmem = int(getattr(info, "vmem_capacity_bytes", vmem))
        for name in ("num_cores", "tensor_cores_per_chip", "num_tensorcores"):
            v = getattr(info, name, None)
            if v:
                cores = int(v)
                break
    except Exception:
        pass
    if cores == 1:
        try:
            kind = jax.devices()[0].device_kind.lower()
            # megacore-style chips: v4, v5p, v7x (2 TCs share one kernel)
            if ("v4" in kind) or ("v7" in kind) or (
                    "v5" in kind and "lite" not in kind and "v5e" not in kind):
                cores = 2
        except Exception:
            pass
    return vmem, cores


def _vmem_estimate_bytes(b_tile, c_tile, d):
    w_tiles = 2 * d * c_tile * 2          # bf16 W tile, double-buffered
    x_tiles = 2 * b_tile * d * 4          # f32 x tile, double-buffered
    xn = b_tile * d * 2                   # bf16 normalized-x scratch
    temps = 4 * b_tile * c_tile * 4       # live f32/i32 temps over the logits tile
    stats = 8 * b_tile * 128 * 4          # column scratch + outputs (lane-padded)
    return w_tiles + x_tiles + xn + temps + stats


# --------------------------------------------------------------------------
# Wrapper
# --------------------------------------------------------------------------
def amsoftmax_forward(x, W, labels, margin=0.2, scale=30.0,
                      b_tile=None, c_tile=None):
    """x: (B, D) f32, W: (D, C) f32, labels: (B,) int -> (loss, acc%)."""
    B, D = x.shape
    C = W.shape[1]

    # --- one-time W column L2-normalization, hoisted out of the kernel and
    #     cast to bf16 (halves the dominant HBM stream). Same math as forward.
    Wf = W.astype(jnp.float32)
    wn = (Wf * jax.lax.rsqrt(
        jnp.maximum(jnp.sum(Wf * Wf, axis=0, keepdims=True), 1e-24))
    ).astype(jnp.bfloat16)

    vmem_bytes, n_cores = _tpu_vmem_and_cores()

    # --- tile heuristics
    b_full = _round_up(B, 8)
    auto_b = b_tile is None
    auto_c = c_tile is None
    if auto_b:
        b_tile = min(256, b_full)
        # On 2-TensorCore chips make sure the "parallel" batch axis has at
        # least 2 tiles so both cores get work.
        if n_cores >= 2 and b_full >= 16 and b_full <= b_tile:
            b_tile = max(8, _round_up(-(-b_full // 2), 8))
    b_tile = _round_up(b_tile, 8)
    if auto_c:
        c_tile = min(512, _round_up(C, 128))
    c_tile = _round_up(c_tile, 128)

    # --- VMEM budgeting: shrink auto-chosen tiles until the double-buffered
    #     tiles + live temps fit comfortably (matters on v7x's 64 MiB VMEM).
    budget = int(0.35 * vmem_bytes)
    if auto_c:
        while _vmem_estimate_bytes(b_tile, c_tile, D) > budget and c_tile > 128:
            c_tile = max(128, _round_up(c_tile // 2, 128))
    if auto_b:
        while _vmem_estimate_bytes(b_tile, c_tile, D) > budget and b_tile > 8:
            b_tile = max(8, _round_up(b_tile // 2, 8))
    est = _vmem_estimate_bytes(b_tile, c_tile, D)
    vmem_limit = int(min(max(2 * est, 32 * 1024 * 1024), 0.9 * vmem_bytes))

    B_pad = _round_up(B, b_tile)
    C_pad = _round_up(C, c_tile)

    x_p = x.astype(jnp.float32)
    if B_pad != B:
        x_p = jnp.pad(x_p, ((0, B_pad - B), (0, 0)))
    wn_p = wn
    if C_pad != C:
        wn_p = jnp.pad(wn_p, ((0, 0), (0, C_pad - C)))
    lab_p = labels.reshape(B, 1).astype(jnp.int32)
    if B_pad != B:
        lab_p = jnp.pad(lab_p, ((0, B_pad - B), (0, 0)))

    grid = (B_pad // b_tile, C_pad // c_tile)

    kernel = functools.partial(
        _amsoftmax_kernel, margin=float(margin), scale=float(scale),
        num_classes=C, c_tile=c_tile, mask_classes=(C_pad != C))

    row_loss, row_correct = pl.pallas_call(
        kernel,
        grid=grid,
        in_specs=[
            pl.BlockSpec((b_tile, D), lambda i, c: (i, 0)),    # x (fetched once/tile)
            pl.BlockSpec((D, c_tile), lambda i, c: (0, c)),    # wn bf16 (pipelined over C)
            pl.BlockSpec((b_tile, 1), lambda i, c: (i, 0)),    # labels
        ],
        out_specs=(
            pl.BlockSpec((b_tile, 1), lambda i, c: (i, 0)),    # per-row loss
            pl.BlockSpec((b_tile, 1), lambda i, c: (i, 0)),    # per-row correct
        ),
        out_shape=(
            jax.ShapeDtypeStruct((B_pad, 1), jnp.float32),
            jax.ShapeDtypeStruct((B_pad, 1), jnp.float32),
        ),
        scratch_shapes=[
            pltpu.VMEM((b_tile, D), jnp.bfloat16),  # scaled, normalized x tile (bf16)
            pltpu.VMEM((b_tile, 1), jnp.float32),   # running max
            pltpu.VMEM((b_tile, 1), jnp.float32),   # running sum-exp
            pltpu.VMEM((b_tile, 1), jnp.float32),   # logit at label
            pltpu.VMEM((b_tile, 1), jnp.int32),     # running argmax
        ],
        compiler_params=pltpu.CompilerParams(
            # Batch tiles shard across TensorCores; the class axis is an
            # online reduction and must stay sequential (last).
            dimension_semantics=("parallel", "arbitrary"),
            vmem_limit_bytes=vmem_limit),
    )(x_p, wn_p, lab_p)

    # Final mean over the true batch (padded rows dropped here, once).
    loss = jnp.sum(row_loss[:B, 0]) / B
    acc = 100.0 * jnp.sum(row_correct[:B, 0]) / B
    return loss, acc


# --------------------------------------------------------------------------
# Pure-JAX reference of the PyTorch forward (optionally bf16-MXU math)
# --------------------------------------------------------------------------
def _reference(x, W, labels, margin, scale, emulate_bf16):
    C = W.shape[1]
    onehot = jax.nn.one_hot(labels, C, dtype=jnp.float32)
    if emulate_bf16:
        xn_s = (x * (jax.lax.rsqrt(
            jnp.maximum(jnp.sum(x * x, axis=1, keepdims=True), 1e-24)) * scale)
        ).astype(jnp.bfloat16)
        wn = (W * jax.lax.rsqrt(
            jnp.maximum(jnp.sum(W * W, axis=0, keepdims=True), 1e-24))
        ).astype(jnp.bfloat16)
        logits = jnp.dot(xn_s, wn, preferred_element_type=jnp.float32) \
            - scale * margin * onehot
    else:
        xn = x / jnp.maximum(jnp.linalg.norm(x, axis=1, keepdims=True), 1e-12)
        wn = W / jnp.maximum(jnp.linalg.norm(W, axis=0, keepdims=True), 1e-12)
        logits = scale * (xn @ wn - margin * onehot)
    lse = jax.nn.logsumexp(logits, axis=1)
    lbl_logit = jnp.take_along_axis(logits, labels[:, None], axis=1)[:, 0]
    loss = jnp.mean(lse - lbl_logit)
    acc = 100.0 * jnp.mean((jnp.argmax(logits, axis=1) == labels).astype(jnp.float32))
    return loss, acc


if __name__ == "__main__":
    margin, scale = 0.2, 30.0
    key = jax.random.PRNGKey(0)
    k1, k2 = jax.random.split(key)

    def make_inputs(k, B, D, C):
        kx, kw, kl = jax.random.split(k, 3)
        x = jax.random.normal(kx, (B, D), dtype=jnp.float32)
        xavier_std = math.sqrt(2.0 / (D + C))   # nn.init.xavier_normal_(W, gain=1)
        W = xavier_std * jax.random.normal(kw, (D, C), dtype=jnp.float32)
        labels = jax.random.randint(kl, (B,), 0, C, dtype=jnp.int32)
        return x, W, labels

    # ---- case 1: small shapes (single class tile)
    x, W, labels = make_inputs(k1, B=8, D=32, C=16)
    loss, acc = amsoftmax_forward(x, W, labels, margin, scale)
    jax.block_until_ready((loss, acc))

    loss_bf, acc_bf = _reference(x, W, labels, margin, scale, emulate_bf16=True)
    loss_f32, acc_f32 = _reference(x, W, labels, margin, scale, emulate_bf16=False)
    assert jnp.allclose(loss, loss_bf, atol=5e-3, rtol=1e-3), (loss, loss_bf)
    assert jnp.allclose(acc, acc_bf, atol=1e-3), (acc, acc_bf)
    assert jnp.allclose(loss, loss_f32, atol=1e-1, rtol=5e-2), (loss, loss_f32)

    # ---- case 2: forces batch tiling, class tiling and row/class padding
    x2, W2, labels2 = make_inputs(k2, B=20, D=48, C=300)
    loss2, acc2 = amsoftmax_forward(x2, W2, labels2, margin, scale,
                                    b_tile=8, c_tile=128)
    jax.block_until_ready((loss2, acc2))

    loss2_bf, acc2_bf = _reference(x2, W2, labels2, margin, scale, emulate_bf16=True)
    loss2_f32, _ = _reference(x2, W2, labels2, margin, scale, emulate_bf16=False)
    assert jnp.allclose(loss2, loss2_bf, atol=5e-3, rtol=1e-3), (loss2, loss2_bf)
    assert jnp.allclose(acc2, acc2_bf, atol=1e-3), (acc2, acc2_bf)
    assert jnp.allclose(loss2, loss2_f32, atol=1e-1, rtol=5e-2), (loss2, loss2_f32)

    print("KERNEL_OK")
</pallas_src>

<mosaic_0001>
module attributes {stable_mosaic.version = 11 : i64} {
  func.func @_amsoftmax_kernel(%arg0: i32, %arg1: i32, %arg2: memref<8x32xf32, #tpu.memory_space<vmem>>, %arg3: memref<32x128xbf16, #tpu.memory_space<vmem>>, %arg4: memref<8x1xi32, #tpu.memory_space<vmem>>, %arg5: memref<8x1xf32, #tpu.memory_space<vmem>>, %arg6: memref<8x1xf32, #tpu.memory_space<vmem>>, %arg7: memref<8x32xbf16, #tpu.memory_space<vmem>>, %arg8: memref<8x1xf32, #tpu.memory_space<vmem>>, %arg9: memref<8x1xf32, #tpu.memory_space<vmem>>, %arg10: memref<8x1xf32, #tpu.memory_space<vmem>>, %arg11: memref<8x1xi32, #tpu.memory_space<vmem>>) attributes {dimension_semantics = [#tpu.dimension_semantics<parallel>, #tpu.dimension_semantics<arbitrary>], iteration_bounds = array<i64: 1, 1>, scalar_prefetch = 0 : i64, scratch_operands = 5 : i64, tpu.core_type = #tpu.core_type<tc>, window_params = [{transform_indices = @transform_0, window_bounds = array<i64: 8, 32>}, {transform_indices = @transform_1, window_bounds = array<i64: 32, 128>}, {transform_indices = @transform_2, window_bounds = array<i64: 8, 1>}, {transform_indices = @transform_3, window_bounds = array<i64: 8, 1>}, {transform_indices = @transform_4, window_bounds = array<i64: 8, 1>}]} {
    %c0_i32 = arith.constant 0 : i32
    %0 = arith.cmpi eq, %arg1, %c0_i32 : i32
    %1 = arith.extui %0 : i1 to i32
    %c0_i32_0 = arith.constant 0 : i32
    %2 = arith.cmpi ne, %1, %c0_i32_0 : i32
    scf.if %2 {
      %c0_32 = arith.constant 0 : index
      %c0_33 = arith.constant 0 : index
      %62 = vector.load %arg2[%c0_32, %c0_33] : memref<8x32xf32, #tpu.memory_space<vmem>>, vector<8x32xf32>
      %63 = arith.mulf %62, %62 : vector<8x32xf32>
      %cst_34 = arith.constant dense<0.000000e+00> : vector<8xf32>
      %64 = vector.multi_reduction <add>, %63, %cst_34 [1] : vector<8x32xf32> to vector<8xf32>
      %65 = vector.shape_cast %64 : vector<8xf32> to vector<8x1xf32>
      %cst_35 = arith.constant 1.000000e-24 : f32
      %66 = vector.broadcast %cst_35 : f32 to vector<8x1xf32>
      %67 = arith.maximumf %65, %66 : vector<8x1xf32>
      %68 = math.rsqrt %67 : vector<8x1xf32>
      %cst_36 = arith.constant 3.000000e+01 : f32
      %69 = vector.broadcast %cst_36 : f32 to vector<8x1xf32>
      %70 = arith.mulf %68, %69 : vector<8x1xf32>
      %71 = vector.broadcast %70 : vector<8x1xf32> to vector<8x32xf32>
      %72 = arith.mulf %62, %71 : vector<8x32xf32>
      %73 = arith.truncf %72 : vector<8x32xf32> to vector<8x32xbf16>
      %c0_37 = arith.constant 0 : index
      %c0_38 = arith.constant 0 : index
      %74 = vector.load %arg7[%c0_37, %c0_38] : memref<8x32xbf16, #tpu.memory_space<vmem>>, vector<8x32xbf16>
      tpu.vector_store %arg7[%c0_37, %c0_38], %73 {strides = array<i32>} : memref<8x32xbf16, #tpu.memory_space<vmem>>, vector<8x32xbf16>,
      %cst_39 = arith.constant 0xFF800000 : f32
      %75 = vector.broadcast %cst_39 : f32 to vector<8x1xf32>
      %c0_40 = arith.constant 0 : index
      %c0_41 = arith.constant 0 : index
      %76 = vector.load %arg8[%c0_40, %c0_41] : memref<8x1xf32, #tpu.memory_space<vmem>>, vector<8x1xf32>
      tpu.vector_store %arg8[%c0_40, %c0_41], %75 {strides = array<i32>} : memref<8x1xf32, #tpu.memory_space<vmem>>, vector<8x1xf32>,
      %cst_42 = arith.constant 0.000000e+00 : f32
      %77 = vector.broadcast %cst_42 : f32 to vector<8x1xf32>
      %c0_43 = arith.constant 0 : index
      %c0_44 = arith.constant 0 : index
      %78 = vector.load %arg9[%c0_43, %c0_44] : memref<8x1xf32, #tpu.memory_space<vmem>>, vector<8x1xf32>
      tpu.vector_store %arg9[%c0_43, %c0_44], %77 {strides = array<i32>} : memref<8x1xf32, #tpu.memory_space<vmem>>, vector<8x1xf32>,
      %cst_45 = arith.constant 0.000000e+00 : f32
      %79 = vector.broadcast %cst_45 : f32 to vector<8x1xf32>
      %c0_46 = arith.constant 0 : index
      %c0_47 = arith.constant 0 : index
      %80 = vector.load %arg10[%c0_46, %c0_47] : memref<8x1xf32, #tpu.memory_space<vmem>>, vector<8x1xf32>
      tpu.vector_store %arg10[%c0_46, %c0_47], %79 {strides = array<i32>} : memref<8x1xf32, #tpu.memory_space<vmem>>, vector<8x1xf32>,
      %c0_i32_48 = arith.constant 0 : i32
      %81 = vector.broadcast %c0_i32_48 : i32 to vector<8x1xi32>
      %c0_49 = arith.constant 0 : index
      %c0_50 = arith.constant 0 : index
      %82 = vector.load %arg11[%c0_49, %c0_50] : memref<8x1xi32, #tpu.memory_space<vmem>>, vector<8x1xi32>
      tpu.vector_store %arg11[%c0_49, %c0_50], %81 {strides = array<i32>} : memref<8x1xi32, #tpu.memory_space<vmem>>, vector<8x1xi32>,
    } else {
    }
    %c0 = arith.constant 0 : index
    %c0_1 = arith.constant 0 : index
    %3 = vector.load %arg7[%c0, %c0_1] : memref<8x32xbf16, #tpu.memory_space<vmem>>, vector<8x32xbf16>
    %c0_2 = arith.constant 0 : index
    %c0_3 = arith.constant 0 : index
    %4 = vector.load %arg3[%c0_2, %c0_3] : memref<32x128xbf16, #tpu.memory_space<vmem>>, vector<32x128xbf16>
    %cst = arith.constant dense<0.000000e+00> : vector<8x128xf32>
    %5 = tpu.matmul %3, %4, %cst {dimension_numbers = #tpu.dot_dimension_numbers<[1], [0], [0], [1], [0, 0, 1, 1], [], []>} : vector<8x32xbf16>, vector<32x128xbf16>, vector<8x128xf32> -> vector<8x128xf32>
    %c0_4 = arith.constant 0 : index
    %c0_5 = arith.constant 0 : index
    %6 = vector.load %arg4[%c0_4, %c0_5] : memref<8x1xi32, #tpu.memory_space<vmem>>, vector<8x1xi32>
    %c128_i32 = arith.constant 128 : i32
    %7 = arith.muli %arg1, %c128_i32 : i32
    %8 = tpu.iota {dimensions = array<i32: 1>} : vector<1x128xi32>
    %9 = vector.broadcast %7 : i32 to vector<1x128xi32>
    %10 = arith.addi %9, %8 : vector<1x128xi32>
    %11 = vector.broadcast %10 : vector<1x128xi32> to vector<8x128xi32>
    %12 = vector.broadcast %6 : vector<8x1xi32> to vector<8x128xi32>
    %13 = arith.cmpi eq, %11, %12 : vector<8x128xi32>
    %c16_i32 = arith.constant 16 : i32
    %14 = vector.broadcast %c16_i32 : i32 to vector<1x128xi32>
    %15 = arith.cmpi slt, %10, %14 : vector<1x128xi32>
    %cst_6 = arith.constant 0.000000e+00 : f32
    %cst_7 = arith.constant 0xFF800000 : f32
    %16 = vector.broadcast %cst_6 : f32 to vector<1x128xf32>
    %17 = vector.broadcast %cst_7 : f32 to vector<1x128xf32>
    %18 = arith.select %15, %16, %17 : vector<1x128xi1>, vector<1x128xf32>
    %cst_8 = arith.constant -6.000000e+00 : f32
    %19 = vector.broadcast %cst_8 : f32 to vector<8x128xf32>
    %20 = vector.shape_cast %18 : vector<1x128xf32> to vector<1x128xf32>
    %21 = vector.broadcast %20 : vector<1x128xf32> to vector<8x128xf32>
    %22 = arith.select %13, %19, %21 : vector<8x128xi1>, vector<8x128xf32>
    %23 = arith.addf %5, %22 : vector<8x128xf32>
    %cst_9 = arith.constant dense<0xFF800000> : vector<8xf32>
    %24 = vector.multi_reduction <maximumf>, %23, %cst_9 [1] : vector<8x128xf32> to vector<8xf32>
    %25 = vector.shape_cast %24 : vector<8xf32> to vector<8x1xf32>
    %26 = vector.broadcast %25 : vector<8x1xf32> to vector<8x128xf32>
    %27 = arith.cmpf oeq, %23, %26 : vector<8x128xf32>
    %c2147483647_i32 = arith.constant 2147483647 : i32
    %28 = vector.shape_cast %10 : vector<1x128xi32> to vector<1x128xi32>
    %29 = vector.broadcast %28 : vector<1x128xi32> to vector<8x128xi32>
    %30 = vector.broadcast %c2147483647_i32 : i32 to vector<8x128xi32>
    %31 = arith.select %27, %29, %30 : vector<8x128xi1>, vector<8x128xi32>
    %cst_10 = arith.constant dense<2147483647> : vector<8xi32>
    %32 = vector.multi_reduction <minsi>, %31, %cst_10 [1] : vector<8x128xi32> to vector<8xi32>
    %33 = vector.shape_cast %32 : vector<8xi32> to vector<8x1xi32>
    %c0_11 = arith.constant 0 : index
    %c0_12 = arith.constant 0 : index
    %34 = vector.load %arg8[%c0_11, %c0_12] : memref<8x1xf32, #tpu.memory_space<vmem>>, vector<8x1xf32>
    %35 = arith.maximumf %34, %25 : vector<8x1xf32>
    %36 = vector.broadcast %35 : vector<8x1xf32> to vector<8x128xf32>
    %37 = arith.subf %23, %36 : vector<8x128xf32>
    %38 = math.exp %37 : vector<8x128xf32>
    %39 = arith.subf %34, %35 : vector<8x1xf32>
    %40 = math.exp %39 : vector<8x1xf32>
    %c0_13 = arith.constant 0 : index
    %c0_14 = arith.constant 0 : index
    %41 = vector.load %arg9[%c0_13, %c0_14] : memref<8x1xf32, #tpu.memory_space<vmem>>, vector<8x1xf32>
    %42 = arith.mulf %40, %41 : vector<8x1xf32>
    %cst_15 = arith.constant dense<0.000000e+00> : vector<8xf32>
    %43 = vector.multi_reduction <add>, %38, %cst_15 [1] : vector<8x128xf32> to vector<8xf32>
    %44 = vector.shape_cast %43 : vector<8xf32> to vector<8x1xf32>
    %45 = arith.addf %42, %44 : vector<8x1xf32>
    %c0_16 = arith.constant 0 : index
    %c0_17 = arith.constant 0 : index
    %46 = vector.load %arg9[%c0_16, %c0_17] : memref<8x1xf32, #tpu.memory_space<vmem>>, vector<8x1xf32>
    tpu.vector_store %arg9[%c0_16, %c0_17], %45 {strides = array<i32>} : memref<8x1xf32, #tpu.memory_space<vmem>>, vector<8x1xf32>,
    %47 = arith.cmpf ogt, %25, %34 : vector<8x1xf32>
    %c0_18 = arith.constant 0 : index
    %c0_19 = arith.constant 0 : index
    %48 = vector.load %arg11[%c0_18, %c0_19] : memref<8x1xi32, #tpu.memory_space<vmem>>, vector<8x1xi32>
    %49 = arith.select %47, %33, %48 : vector<8x1xi1>, vector<8x1xi32>
    %c0_20 = arith.constant 0 : index
    %c0_21 = arith.constant 0 : index
    %50 = vector.load %arg11[%c0_20, %c0_21] : memref<8x1xi32, #tpu.memory_space<vmem>>, vector<8x1xi32>
    tpu.vector_store %arg11[%c0_20, %c0_21], %49 {strides = array<i32>} : memref<8x1xi32, #tpu.memory_space<vmem>>, vector<8x1xi32>,
    %c0_22 = arith.constant 0 : index
    %c0_23 = arith.constant 0 : index
    %51 = vector.load %arg8[%c0_22, %c0_23] : memref<8x1xf32, #tpu.memory_space<vmem>>, vector<8x1xf32>
    tpu.vector_store %arg8[%c0_22, %c0_23], %35 {strides = array<i32>} : memref<8x1xf32, #tpu.memory_space<vmem>>, vector<8x1xf32>,
    %c0_24 = arith.constant 0 : index
    %c0_25 = arith.constant 0 : index
    %52 = vector.load %arg10[%c0_24, %c0_25] : memref<8x1xf32, #tpu.memory_space<vmem>>, vector<8x1xf32>
    %cst_26 = arith.constant 0.000000e+00 : f32
    %53 = vector.broadcast %cst_26 : f32 to vector<8x128xf32>
    %54 = arith.select %13, %23, %53 : vector<8x128xi1>, vector<8x128xf32>
    %cst_27 = arith.constant dense<0.000000e+00> : vector<8xf32>
    %55 = vector.multi_reduction <add>, %54, %cst_27 [1] : vector<8x128xf32> to vector<8xf32>
    %56 = vector.shape_cast %55 : vector<8xf32> to vector<8x1xf32>
    %57 = arith.addf %52, %56 : vector<8x1xf32>
    %c0_28 = arith.constant 0 : index
    %c0_29 = arith.constant 0 : index
    %58 = vector.load %arg10[%c0_28, %c0_29] : memref<8x1xf32, #tpu.memory_space<vmem>>, vector<8x1xf32>
    tpu.vector_store %arg10[%c0_28, %c0_29], %57 {strides = array<i32>} : memref<8x1xf32, #tpu.memory_space<vmem>>, vector<8x1xf32>,
    %c0_i32_30 = arith.constant 0 : i32
    %59 = arith.cmpi eq, %arg1, %c0_i32_30 : i32
    %60 = arith.extui %59 : i1 to i32
    %c0_i32_31 = arith.constant 0 : i32
    %61 = arith.cmpi ne, %60, %c0_i32_31 : i32
    scf.if %61 {
      %c0_32 = arith.constant 0 : index
      %c0_33 = arith.constant 0 : index
      %62 = vector.load %arg8[%c0_32, %c0_33] : memref<8x1xf32, #tpu.memory_space<vmem>>, vector<8x1xf32>
      %c0_34 = arith.constant 0 : index
      %c0_35 = arith.constant 0 : index
      %63 = vector.load %arg9[%c0_34, %c0_35] : memref<8x1xf32, #tpu.memory_space<vmem>>, vector<8x1xf32>
      %64 = math.log %63 : vector<8x1xf32>
      %65 = arith.addf %62, %64 : vector<8x1xf32>
      %c0_36 = arith.constant 0 : index
      %c0_37 = arith.constant 0 : index
      %66 = vector.load %arg10[%c0_36, %c0_37] : memref<8x1xf32, #tpu.memory_space<vmem>>, vector<8x1xf32>
      %67 = arith.subf %65, %66 : vector<8x1xf32>
      %c0_38 = arith.constant 0 : index
      %c0_39 = arith.constant 0 : index
      %68 = vector.load %arg5[%c0_38, %c0_39] : memref<8x1xf32, #tpu.memory_space<vmem>>, vector<8x1xf32>
      tpu.vector_store %arg5[%c0_38, %c0_39], %67 {strides = array<i32>} : memref<8x1xf32, #tpu.memory_space<vmem>>, vector<8x1xf32>,
      %c0_40 = arith.constant 0 : index
      %c0_41 = arith.constant 0 : index
      %69 = vector.load %arg11[%c0_40, %c0_41] : memref<8x1xi32, #tpu.memory_space<vmem>>, vector<8x1xi32>
      %c0_42 = arith.constant 0 : index
      %c0_43 = arith.constant 0 : index
      %70 = vector.load %arg4[%c0_42, %c0_43] : memref<8x1xi32, #tpu.memory_space<vmem>>, vector<8x1xi32>
      %71 = arith.cmpi eq, %69, %70 : vector<8x1xi32>
      %72 = arith.extui %71 : vector<8x1xi1> to vector<8x1xi32>
      %73 = arith.sitofp %72 : vector<8x1xi32> to vector<8x1xf32>
      %c0_44 = arith.constant 0 : index
      %c0_45 = arith.constant 0 : index
      %74 = vector.load %arg6[%c0_44, %c0_45] : memref<8x1xf32, #tpu.memory_space<vmem>>, vector<8x1xf32>
      tpu.vector_store %arg6[%c0_44, %c0_45], %73 {strides = array<i32>} : memref<8x1xf32, #tpu.memory_space<vmem>>, vector<8x1xf32>,
    } else {
    }
    return
  }
  func.func @transform_0(%arg0: i32, %arg1: i32) -> (i32, i32) {
    %c0_i32 = arith.constant 0 : i32
    %c0_i32_0 = arith.constant 0 : i32
    return %arg0, %c0_i32 : i32, i32
  }
  func.func @transform_1(%arg0: i32, %arg1: i32) -> (i32, i32) {
    %c0_i32 = arith.constant 0 : i32
    %c0_i32_0 = arith.constant 0 : i32
    return %c0_i32, %arg1 : i32, i32
  }
  func.func @transform_2(%arg0: i32, %arg1: i32) -> (i32, i32) {
    %c0_i32 = arith.constant 0 : i32
    %c0_i32_0 = arith.constant 0 : i32
    return %arg0, %c0_i32 : i32, i32
  }
  func.func @transform_3(%arg0: i32, %arg1: i32) -> (i32, i32) {
    %c0_i32 = arith.constant 0 : i32
    %c0_i32_0 = arith.constant 0 : i32
    return %arg0, %c0_i32 : i32, i32
  }
  func.func @transform_4(%arg0: i32, %arg1: i32) -> (i32, i32) {
    %c0_i32 = arith.constant 0 : i32
    %c0_i32_0 = arith.constant 0 : i32
    return %arg0, %c0_i32 : i32, i32
  }
}

</mosaic_0001>

<llo_original>
// kernel: tpu_custom_call.1
$region0: #{tpu_custom_call.1}
  #allocation0 [shape = 'u32[]', space=smem, size = 0x4, offset = 0x4, fixed_abs, tag = 'smem constant byte address 0x4 - core index']
  #allocation1 [shape = 'u32[72,128]{1,0:T(1,128)}', space=vmem, size = 0x9000, scoped, tag = 'internal scratch']
  #allocation2 [shape = 'bf16[8,32]{1,0:T(8,128)(2,1)}', space=vmem, size = 0x800, scoped, tag = 'scratch operand']
  #allocation3 [shape = 'f32[8,1]{1,0:T(8,128)}', space=vmem, size = 0x1000, scoped, tag = 'scratch operand']
  #allocation4 [shape = 'f32[8,1]{1,0:T(8,128)}', space=vmem, size = 0x1000, scoped, tag = 'scratch operand']
  #allocation5 [shape = 'f32[8,1]{1,0:T(8,128)}', space=vmem, size = 0x1000, scoped, tag = 'scratch operand']
  #allocation6 [shape = 's32[8,1]{1,0:T(8,128)}', space=vmem, size = 0x1000, scoped, tag = 'scratch operand']
  %s0 = inlined_call_operand.vmem [shape: f32[8,32], index: 0, kind: input, shape index: {}]
  %s1 = inlined_call_operand.hbm [shape: bf16[32,128], index: 1, kind: input, shape index: {}]
  %s2 = inlined_call_operand.vmem [shape: s32[8,1], index: 2, kind: input, shape index: {}]
  %s3 = inlined_call_operand.vmem [shape: f32[8,1], index: 3, kind: output, shape index: {0}]
  %s4 = inlined_call_operand.vmem [shape: f32[8,1], index: 4, kind: output, shape index: {1}]
  %5 = xla_tuple %s3, %s4
  %s6 = sld [smem:[#allocation0]]
  $region42: #{tpu_custom_call.1} parent=0
    _
  %s8 = ssub.s32 1, %s6
  %s9 = scalar_select 0, %s8, %s6
  $region1: #{tpu_custom_call.1} parent=0
    #allocation7 [shape = 'u8[8192]{0}', space=vmem, size = 0x2000, scoped, tag = 'input window, operand 1, single buffered']
    #allocation8 [shape = 's32[1]{0}', space=sflag, size = 0x4, scoped, tag = 'scoped memory for tpu_custom_call.1']
    %10 = vsyncpa [#allocation8], 0
    // Predicated region
    $region2: #{tpu_custom_call.1} parent=1 // pred_check
      _
    $region3: #{tpu_custom_call.1} parent=1 // pred_check_branch
      %12 = sbr.rel (0) target = $region5
    $region4: #{tpu_custom_call.1} parent=1 // pred_region
      _
    $region5: #{tpu_custom_call.1} parent=1 // pred_fallthru
      _
    // Predicated region
    $region6: #{tpu_custom_call.1} parent=1 // pred_check
      _
    $region7: #{tpu_custom_call.1} parent=1 // pred_check_branch
      %14 = sbr.rel (0) target = $region9
    $region8: #{tpu_custom_call.1} parent=1 // pred_region
      %16 = vsyncadd [#allocation8], 0
      %s17 = sshll.u32 %s1, 4
      %s18 = int_to_ptr.hbm [resolvable:$true] %s17
      %s19 = sshll.u32 [#allocation7], 4
      %s20 = int_to_ptr.vmem [resolvable:$true] %s19
      %25 = dma.hbm_to_vmem [thread:$0]  %s18, 256, %s20, [#allocation8], 64, 64, 4
    $region9: #{tpu_custom_call.1} parent=1 // pred_fallthru
      _
    // Predicated region
    $region10: #{tpu_custom_call.1} parent=1 // pred_check
      _
    $region11: #{tpu_custom_call.1} parent=1 // pred_check_branch
      %27 = sbr.rel (0) target = $region13
    $region12: #{tpu_custom_call.1} parent=1 // pred_region
      _
    $region13: #{tpu_custom_call.1} parent=1 // pred_fallthru
      _
    // Predicated region
    $region14: #{tpu_custom_call.1} parent=1 // pred_check
      _
    $region15: #{tpu_custom_call.1} parent=1 // pred_check_branch
      %29 = sbr.rel (0) target = $region17
    $region16: #{tpu_custom_call.1} parent=1 // pred_region
      %31 = dma.done [#allocation8], 256
    $region17: #{tpu_custom_call.1} parent=1 // pred_fallthru
      _
    %p33 = scmp.eq.s32.totalorder 0, 0
    // Predicated region
    $region18: #{tpu_custom_call.1} parent=1 // pred_check
      %p34 = pneg %p33
    $region19: #{tpu_custom_call.1} parent=1 // pred_check_branch
      %36 = sbr.rel (%p34) target = $region21
    $region20: #{tpu_custom_call.1} parent=1 // pred_region
      %v37 = vld [vmem:[%s0] sm:$0xff]
      %v38 = vmul.f32 %v37, %v37
      %vm39 = vcmask 261120
      %v40 = vsel %vm39, %v38, 0.0
      %41 = vadd.xlane.f32.xlu0 %v40
      %v42 = vpop.xlane.xlu0 %41
      %v43 = vmax.f32 %v42, 1e-24
      %v44 = vrsqrt.pop %v43
      %v45 = vmul.f32 %v44, %v43
      %v46 = vmul.f32 %v45, %v44
      %v47 = vmul.f32 0.5, %v46
      %v48 = vsub.f32 1.5, %v47
      %v49 = vmul.f32 %v44, %v48
      %vm50 = vweird.f32 %v43
      %vm51 = vweird.f32 %v44
      %vm52 = vmor %vm50, %vm51
      %v53 = vsel %vm52, %v44, %v49
      %v54 = vmul.f32 %v53, 30.0
      %v55 = vmul.f32 %v37, %v54
      %v56 = vpack.c.bf16 %v55, %v55
      %vm57 = vcmask 257024
      %58 = vst.msk [vmem:[#allocation2] sm:$0xf] %vm57, %v56
      %vm59 = vcmask 7168
      %60 = vst.msk [vmem:[#allocation3] sm:$0xff] %vm59, -inf
      %61 = vst.msk [vmem:[#allocation4] sm:$0xff] %vm59, 0.0
      %62 = vst.msk [vmem:[#allocation5] sm:$0xff] %vm59, 0.0
      %63 = vst.msk [vmem:[#allocation6] sm:$0xff] %vm59, 0
    $region21: #{tpu_custom_call.1} parent=1 // pred_fallthru
      _
    %v64 = vld [vmem:[#allocation2] sm:$0xf]
    %v65 = vld [vmem:[#allocation7] sm:$0xf]
    %v66 = vld [vmem:[#allocation7 + $0x4] sm:$0xf]
    %v67 = vld [vmem:[#allocation7 + $0x8] sm:$0xf]
    %v68 = vld [vmem:[#allocation7 + $0xc] sm:$0xf]
    %v69 = vld [vmem:[%s2] sm:$0xff]
    %s70 = smul.u32 0, 128
    %v71 = vlaneseq
    %v72 = vand.u32 %v71, 127
    %v73 = vstv %s70
    %v74 = vadd.s32 %v73, %v72
    %75 = vset.pattern.permute.xlu0 0
    %76 = vperm.xlu0 %75, %v69
    %v77 = vpop.permute.xlu0 %76
    %vm78 = vcmp.eq.s32.totalorder %v74, %v77
    %vm79 = vcmp.lt.s32.totalorder %v74, 16
    %v80 = vsel %vm79, 0.0, -inf
    %v81 = vsel %vm78, -6.0, %v80
    %v86 = vunpack.c.l.b16 %v65
    %v87 = vunpack.c.l.b16 %v66
    %v88 = vunpack.c.l.b16 %v67
    %v89 = vunpack.c.l.b16 %v68
    %v90 = vpack.c.b16 %v87, %v86
    %v91 = vpack.c.b16 %v89, %v88
    %vm94 = vcmask 261120
    %v96 = vsel %vm94, %v64, 0
    %98 = vmatpush.bf16.msra.mxu0 0
    %99 = vmatpush.bf16.msra.mxu0 0
    %100 = vmatpush.bf16.msra.mxu0 0
    %101 = vmatpush.bf16.msra.mxu0 0
    %102 = vmatpush.bf16.msra.mxu0 0
    %103 = vmatpush.bf16.msra.mxu0 0
    %104 = vmatpush.bf16.msra.mxu0 %v91
    %105 = vmatpush.bf16.msra.mxu0 %v90
    %106 = vmatmul.bf16.gmra.mxu0 %v96
    %v107 = vpop.f32.mrf.mxu0
    %v108 = vadd.f32 %v81, %v107
    %v109 = vpop.f32.mrf.mxu0
    %110 = vdwg.mxu0
    %111 = vmax.xlane.f32.xlu0 %v108
    %v112 = vpop.xlane.xlu0 %111
    %vm113 = vcmp.eq.f32.partialorder %v108, %v112
    %v114 = vsel %vm113, %v74, 2147483647
    %v115 = vand.u32 %v114, 65535
    %v116 = vshra.s32 %v114, 16
    %v117 = vcvt.s32.f32 %v115
    %v118 = vcvt.s32.f32 %v116
    %119 = vmin.xlane.f32.xlu0 %v118
    %v120 = vpop.xlane.xlu0 %119
    %vm121 = vcmp.eq.f32.partialorder %v118, %v120
    %v122 = vsel %vm121, %v117, inf
    %123 = vmin.xlane.f32.xlu0 %v122
    %v124 = vpop.xlane.xlu0 %123
    %v125 = vcvt.f32.s32 %v124
    %v126 = vcvt.f32.s32 %v120
    %v127 = vshll.u32 %v126, 16
    %v128 = vadd.s32 %v127, %v125
    %v129 = vld [vmem:[#allocation3] sm:$0xff]
    %v130 = vmax.f32 %v129, %v112
    %132 = vset.pattern.permute.xlu0 0
    %133 = vperm.xlu0 %132, %v130
    %v134 = vpop.permute.xlu0 %133
    %v136 = vsub.f32 %v108, %v134
    %v137 = vmul.f32 %v136, 1.442695
    %v138 = vpow.pop %v137
    %v139 = vsub.f32 %v129, %v130
    %v140 = vmul.f32 %v139, 1.442695
    %v141 = vpow.pop %v140
    %v142 = vld [vmem:[#allocation4] sm:$0xff]
    %v143 = vmul.f32 %v141, %v142
    %144 = vadd.xlane.f32.xlu0 %v138
    %v145 = vpop.xlane.xlu0 %144
    %v146 = vadd.f32 %v143, %v145
    %vm147 = vcmask 7168
    %148 = vst.msk [vmem:[#allocation4] sm:$0xff] %vm147, %v146
    %vm149 = vcmp.gt.f32.partialorder %v112, %v129
    %v150 = vld [vmem:[#allocation6] sm:$0xff]
    %v151 = vsel %vm149, %v128, %v150
    %152 = vst.msk [vmem:[#allocation6] sm:$0xff] %vm147, %v151
    %153 = vst.msk [vmem:[#allocation3] sm:$0xff] %vm147, %v130
    %v154 = vld [vmem:[#allocation5] sm:$0xff]
    %v155 = vsel %vm78, %v108, 0.0
    %156 = vadd.xlane.f32.xlu0 %v155
    %v157 = vpop.xlane.xlu0 %156
    %v158 = vadd.f32 %v154, %v157
    %159 = vst.msk [vmem:[#allocation5] sm:$0xff] %vm147, %v158
    // Predicated region
    $region22: #{tpu_custom_call.1} parent=1 // pred_check
      %p160 = pneg %p33
    $region23: #{tpu_custom_call.1} parent=1 // pred_check_branch
      %162 = sbr.rel (%p160) target = $region25
    $region24: #{tpu_custom_call.1} parent=1 // pred_region
      %v163 = vld [vmem:[#allocation3] sm:$0xff]
      %v164 = vld [vmem:[#allocation4] sm:$0xff]
      %v165 = vlog2.pop %v164
      %v166 = vmul.f32 %v165, 0.6931472
      %v167 = vadd.f32 %v163, %v166
      %v168 = vld [vmem:[#allocation5] sm:$0xff]
      %v169 = vsub.f32 %v167, %v168
      %170 = vst.msk [vmem:[%s3] sm:$0xff] %vm147, %v169
      %v171 = vld [vmem:[#allocation6] sm:$0xff]
      %v172 = vld [vmem:[%s2] sm:$0xff]
      %vm173 = vcmp.eq.s32.totalorder %v171, %v172
      %v174 = vsel %vm173, 1, 0
      %v175 = vcvt.s32.f32 %v174
      %176 = vst.msk [vmem:[%s4] sm:$0xff] %vm147, %v175
    $region25: #{tpu_custom_call.1} parent=1 // pred_fallthru
      _
    // Predicated region
    $region26: #{tpu_custom_call.1} parent=1 // pred_check
      _
    $region27: #{tpu_custom_call.1} parent=1 // pred_check_branch
      %178 = sbr.rel (0) target = $region29
    $region28: #{tpu_custom_call.1} parent=1 // pred_region
      _
    $region29: #{tpu_custom_call.1} parent=1 // pred_fallthru
      _
    // Predicated region
    $region30: #{tpu_custom_call.1} parent=1 // pred_check
      _
    $region31: #{tpu_custom_call.1} parent=1 // pred_check_branch
      %180 = sbr.rel (0) target = $region33
    $region32: #{tpu_custom_call.1} parent=1 // pred_region
      _
    $region33: #{tpu_custom_call.1} parent=1 // pred_fallthru
      _
    // Predicated region
    $region34: #{tpu_custom_call.1} parent=1 // pred_check
      _
    $region35: #{tpu_custom_call.1} parent=1 // pred_check_branch
      %182 = sbr.rel (0) target = $region37
    $region36: #{tpu_custom_call.1} parent=1 // pred_region
      _
    $region37: #{tpu_custom_call.1} parent=1 // pred_fallthru
      _
    // Predicated region
    $region38: #{tpu_custom_call.1} parent=1 // pred_check
      _
    $region39: #{tpu_custom_call.1} parent=1 // pred_check_branch
      %184 = sbr.rel (0) target = $region41
    $region40: #{tpu_custom_call.1} parent=1 // pred_region
      _
    $region41: #{tpu_custom_call.1} parent=1 // pred_fallthru
      _
    %185 = vsyncpa [#allocation8], 1

</llo_original>
